<compile_context>
chip_gen: v7x
topology: tpu7x:2x2x1
jax: 0.10.0
libtpu: 0.0.40
codegen_flags: <defaults>
</compile_context>

<pallas_src>
import functools

import jax
import jax.numpy as jnp
from jax import lax
from jax.experimental import pallas as pl
from jax.experimental.pallas import tpu as pltpu


def _round_up(x, m):
    return ((x + m - 1) // m) * m


def _groupnorm_kernel(x_ref, w_ref, b_ref, o_ref, *, eps, inv_n, inv_nm1):
    """One block = (npb samples, gpb groups, Cg*H*W lanes)."""
    # Single-pass per-(sample, group) statistics: lane reductions, f32 accumulation.
    xf = x_ref[...].astype(jnp.float32)
    s = jnp.sum(xf, axis=-1, keepdims=True)            # (npb, gpb, 1)
    ss = jnp.sum(xf * xf, axis=-1, keepdims=True)      # (npb, gpb, 1)

    mean = s * inv_n                                   # (npb, gpb, 1)
    # Unbiased variance (torch.Tensor.var default); clamp >= 0 so catastrophic
    # cancellation in the single-pass formula can't make rsqrt produce NaN.
    var = jnp.maximum((ss - s * mean) * inv_nm1, 0.0)
    inv_std = lax.rsqrt(var + eps)                     # (npb, gpb, 1)

    # Normalize then apply the per-channel affine (weight/bias vary along lanes,
    # broadcast over the leading sample dim). 4 VALU ops/element: fine for a
    # memory-bound kernel. The ref read + cast here fuses per-tile.
    xn = (x_ref[...].astype(jnp.float32) - mean) * inv_std
    w = w_ref[...].astype(jnp.float32)                 # (1, gpb, L)
    b = b_ref[...].astype(jnp.float32)                 # (1, gpb, L)
    o_ref[...] = (xn * w + b).astype(o_ref.dtype)


def _divisors(n):
    return [d for d in range(1, n + 1) if n % d == 0]


def _pick_block_dim(n, cap, valid):
    cands = [d for d in _divisors(n) if valid(d)]
    fitting = [d for d in cands if d <= max(1, cap)]
    return max(fitting) if fitting else min(cands)


def _choose_blocks(n, g, row_bytes, *, target_bytes=4 << 20,
                   min_block_bytes=1 << 20, min_steps=4):
    """Pick (samples, groups) per block.

    Blocks must divide (n, g); the groups-per-block dim must be g itself or a
    multiple of 8 (Mosaic (8,128) second-to-last-dim rule).
    """
    g_valid = lambda d: d == g or d % 8 == 0
    sample_bytes = g * row_bytes
    if sample_bytes > target_bytes:
        npb = 1
        gpb = _pick_block_dim(g, target_bytes // max(row_bytes, 1), g_valid)
    else:
        gpb = g
        npb = _pick_block_dim(n, target_bytes // max(sample_bytes, 1), lambda d: True)

    def n_steps(a, b):
        return (n // a) * (g // b)

    # Megacore granularity: prefer >= min_steps grid steps (2 per v7x TC), but
    # never shrink a block below min_block_bytes just to add steps.
    while n_steps(npb, gpb) < min_steps:
        options = []
        if npb > 1:
            nn = _pick_block_dim(n, npb - 1, lambda d: True)
            if nn < npb and nn * gpb * row_bytes >= min_block_bytes:
                options.append((nn, gpb))
        if gpb > 1:
            gg = _pick_block_dim(g, gpb - 1, g_valid)
            if gg < gpb and npb * gg * row_bytes >= min_block_bytes:
                options.append((npb, gg))
        if not options:
            break
        npb, gpb = max(options, key=lambda t: t[0] * t[1])
    return npb, gpb


def _vmem_capacity_bytes():
    try:
        return int(pltpu.get_tpu_info().vmem_capacity_bytes)
    except Exception:
        return 64 << 20   # conservative fallback (v7x-sized VMEM)


def group_norm_2d(x, weight, bias, num_groups=16, eps=1e-5):
    """Pallas TPU GroupNorm2D forward. x: (N, C, H, W); weight/bias: (1, C, 1, 1)."""
    N, C, H, W = x.shape
    G = num_groups
    assert C % G == 0, "channels must be divisible by num_groups"
    Cg = C // G
    HW = H * W
    L = Cg * HW                      # lane dim: one full (sample, group) row
    n_per_group = L

    # Free, contiguous reshapes (pure metadata, no data movement).
    x3 = x.reshape(N, G, L)
    # Per-channel affine params broadcast along H*W once (C*H*W elements),
    # resident in VMEM across all grid steps.
    w3 = jnp.broadcast_to(weight.reshape(1, G, Cg, 1), (1, G, Cg, HW)).reshape(1, G, L)
    b3 = jnp.broadcast_to(bias.reshape(1, G, Cg, 1), (1, G, Cg, HW)).reshape(1, G, L)

    itemsize = jnp.dtype(x.dtype).itemsize
    row_bytes = _round_up(L, 128) * itemsize
    npb, gpb = _choose_blocks(N, G, row_bytes)
    grid = (N // npb, G // gpb)

    # Generation-aware VMEM budget: double-buffered in/out blocks, a few
    # block-sized f32 temporaries, resident affine tables, plus slack; capped
    # at 75% of physical VMEM (~48 MiB on v7x, ~96 MiB on v5e/v6e).
    gpb_pad = _round_up(gpb, 8)
    lane_pad = _round_up(L, 128)
    block_bytes = npb * gpb_pad * lane_pad * itemsize
    block_f32_bytes = npb * gpb_pad * lane_pad * 4
    table_bytes = 2 * gpb_pad * lane_pad * jnp.dtype(w3.dtype).itemsize
    vmem_need = 4 * block_bytes + 3 * block_f32_bytes + 2 * table_bytes + (4 << 20)
    vmem_limit = int(min(max(vmem_need, 32 << 20), (_vmem_capacity_bytes() * 3) // 4))

    # TODO(synk): a single (sample, group) row much larger than ~VMEM/8 would need
    # an extra "arbitrary" sub-grid over the lane axis with partial-stat
    # accumulation; not needed for the shapes this module targets.

    kernel = functools.partial(
        _groupnorm_kernel,
        eps=float(eps),
        inv_n=1.0 / float(n_per_group),
        inv_nm1=1.0 / float(max(n_per_group - 1, 1)),  # torch.Tensor.var(): unbiased
    )

    out3 = pl.pallas_call(
        kernel,
        out_shape=jax.ShapeDtypeStruct((N, G, L), x.dtype),
        grid=grid,
        in_specs=[
            pl.BlockSpec((npb, gpb, L), lambda i, j: (i, j, 0)),
            pl.BlockSpec((1, gpb, L), lambda i, j: (0, j, 0)),   # resident affine tables
            pl.BlockSpec((1, gpb, L), lambda i, j: (0, j, 0)),
        ],
        out_specs=pl.BlockSpec((npb, gpb, L), lambda i, j: (i, j, 0)),
        compiler_params=pltpu.CompilerParams(
            dimension_semantics=("parallel", "parallel"),
            vmem_limit_bytes=vmem_limit,
        ),
    )(x3, w3, b3)
    return out3.reshape(N, C, H, W)


def group_norm_2d_ref(x, weight, bias, num_groups=16, eps=1e-5):
    """Pure-JAX reference mirroring the PyTorch forward (unbiased variance)."""
    N, C, H, W = x.shape
    xr = x.reshape(N, num_groups, -1)
    mean = xr.mean(-1, keepdims=True)
    var = xr.var(-1, keepdims=True, ddof=1)
    xr = (xr - mean) / jnp.sqrt(var + eps)
    return xr.reshape(N, C, H, W) * weight + bias


if __name__ == "__main__":
    # Small, module-consistent shapes: channels divisible by num_groups=16,
    # spatial 16x16 -> lane dim Cg*H*W = 512 (multiple of 128).
    N, C, H, W = 2, 32, 16, 16
    num_groups = 16
    eps = 1e-5

    key = jax.random.PRNGKey(0)
    kx, kw, kb = jax.random.split(key, 3)

    x = jax.random.normal(kx, (N, C, H, W), dtype=jnp.float32)
    # Module __init__: weight = ones(1,C,1,1), bias = zeros(1,C,1,1); add a
    # deterministic perturbation so the affine path is actually exercised.
    weight = jnp.ones((1, C, 1, 1), jnp.float32) + 0.1 * jax.random.normal(
        kw, (1, C, 1, 1), dtype=jnp.float32)
    bias = jnp.zeros((1, C, 1, 1), jnp.float32) + 0.1 * jax.random.normal(
        kb, (1, C, 1, 1), dtype=jnp.float32)

    out = group_norm_2d(x, weight, bias, num_groups=num_groups, eps=eps)
    out = jax.block_until_ready(out)

    ref = group_norm_2d_ref(x, weight, bias, num_groups=num_groups, eps=eps)
    assert out.shape == (N, C, H, W)
    assert jnp.allclose(out, ref, atol=1e-4, rtol=1e-4), "mismatch vs reference"

    print("KERNEL_OK")
</pallas_src>

<mosaic_0001>
module attributes {stable_mosaic.version = 11 : i64} {
  func.func @_groupnorm_kernel(%arg0: i32, %arg1: i32, %arg2: memref<2x16x512xf32, #tpu.memory_space<vmem>>, %arg3: memref<1x16x512xf32, #tpu.memory_space<vmem>>, %arg4: memref<1x16x512xf32, #tpu.memory_space<vmem>>, %arg5: memref<2x16x512xf32, #tpu.memory_space<vmem>>) attributes {dimension_semantics = [#tpu.dimension_semantics<parallel>, #tpu.dimension_semantics<parallel>], iteration_bounds = array<i64: 1, 1>, scalar_prefetch = 0 : i64, scratch_operands = 0 : i64, tpu.core_type = #tpu.core_type<tc>, window_params = [{transform_indices = @transform_0, window_bounds = array<i64: 2, 16, 512>}, {transform_indices = @transform_1, window_bounds = array<i64: 1, 16, 512>}, {transform_indices = @transform_2, window_bounds = array<i64: 1, 16, 512>}, {transform_indices = @transform_3, window_bounds = array<i64: 2, 16, 512>}]} {
    %c0 = arith.constant 0 : index
    %c0_0 = arith.constant 0 : index
    %c0_1 = arith.constant 0 : index
    %0 = vector.load %arg2[%c0, %c0_0, %c0_1] : memref<2x16x512xf32, #tpu.memory_space<vmem>>, vector<2x16x512xf32>
    %cst = arith.constant dense<0.000000e+00> : vector<2x16xf32>
    %1 = vector.multi_reduction <add>, %0, %cst [2] : vector<2x16x512xf32> to vector<2x16xf32>
    %2 = vector.shape_cast %1 : vector<2x16xf32> to vector<2x16x1xf32>
    %3 = arith.mulf %0, %0 : vector<2x16x512xf32>
    %cst_2 = arith.constant dense<0.000000e+00> : vector<2x16xf32>
    %4 = vector.multi_reduction <add>, %3, %cst_2 [2] : vector<2x16x512xf32> to vector<2x16xf32>
    %5 = vector.shape_cast %4 : vector<2x16xf32> to vector<2x16x1xf32>
    %cst_3 = arith.constant 0.001953125 : f32
    %6 = vector.broadcast %cst_3 : f32 to vector<2x16x1xf32>
    %7 = arith.mulf %2, %6 : vector<2x16x1xf32>
    %8 = arith.mulf %2, %7 : vector<2x16x1xf32>
    %9 = arith.subf %5, %8 : vector<2x16x1xf32>
    %cst_4 = arith.constant 0.00195694715 : f32
    %10 = vector.broadcast %cst_4 : f32 to vector<2x16x1xf32>
    %11 = arith.mulf %9, %10 : vector<2x16x1xf32>
    %cst_5 = arith.constant 0.000000e+00 : f32
    %12 = vector.broadcast %cst_5 : f32 to vector<2x16x1xf32>
    %13 = arith.maximumf %11, %12 : vector<2x16x1xf32>
    %cst_6 = arith.constant 9.99999974E-6 : f32
    %14 = vector.broadcast %cst_6 : f32 to vector<2x16x1xf32>
    %15 = arith.addf %13, %14 : vector<2x16x1xf32>
    %16 = math.rsqrt %15 : vector<2x16x1xf32>
    %c0_7 = arith.constant 0 : index
    %c0_8 = arith.constant 0 : index
    %c0_9 = arith.constant 0 : index
    %17 = vector.load %arg2[%c0_7, %c0_8, %c0_9] : memref<2x16x512xf32, #tpu.memory_space<vmem>>, vector<2x16x512xf32>
    %18 = vector.broadcast %7 : vector<2x16x1xf32> to vector<2x16x512xf32>
    %19 = arith.subf %17, %18 : vector<2x16x512xf32>
    %20 = vector.broadcast %16 : vector<2x16x1xf32> to vector<2x16x512xf32>
    %21 = arith.mulf %19, %20 : vector<2x16x512xf32>
    %c0_10 = arith.constant 0 : index
    %c0_11 = arith.constant 0 : index
    %c0_12 = arith.constant 0 : index
    %22 = vector.load %arg3[%c0_10, %c0_11, %c0_12] : memref<1x16x512xf32, #tpu.memory_space<vmem>>, vector<1x16x512xf32>
    %c0_13 = arith.constant 0 : index
    %c0_14 = arith.constant 0 : index
    %c0_15 = arith.constant 0 : index
    %23 = vector.load %arg4[%c0_13, %c0_14, %c0_15] : memref<1x16x512xf32, #tpu.memory_space<vmem>>, vector<1x16x512xf32>
    %24 = vector.broadcast %22 : vector<1x16x512xf32> to vector<2x16x512xf32>
    %25 = arith.mulf %21, %24 : vector<2x16x512xf32>
    %26 = vector.broadcast %23 : vector<1x16x512xf32> to vector<2x16x512xf32>
    %27 = arith.addf %25, %26 : vector<2x16x512xf32>
    %c0_16 = arith.constant 0 : index
    %c0_17 = arith.constant 0 : index
    %c0_18 = arith.constant 0 : index
    %28 = vector.load %arg5[%c0_16, %c0_17, %c0_18] : memref<2x16x512xf32, #tpu.memory_space<vmem>>, vector<2x16x512xf32>
    tpu.vector_store %arg5[%c0_16, %c0_17, %c0_18], %27 {strides = array<i32>} : memref<2x16x512xf32, #tpu.memory_space<vmem>>, vector<2x16x512xf32>,
    return
  }
  func.func @transform_0(%arg0: i32, %arg1: i32) -> (i32, i32, i32) {
    %c0_i32 = arith.constant 0 : i32
    %c0_i32_0 = arith.constant 0 : i32
    return %arg0, %arg1, %c0_i32 : i32, i32, i32
  }
  func.func @transform_1(%arg0: i32, %arg1: i32) -> (i32, i32, i32) {
    %c0_i32 = arith.constant 0 : i32
    %c0_i32_0 = arith.constant 0 : i32
    %c0_i32_1 = arith.constant 0 : i32
    return %c0_i32, %arg1, %c0_i32_0 : i32, i32, i32
  }
  func.func @transform_2(%arg0: i32, %arg1: i32) -> (i32, i32, i32) {
    %c0_i32 = arith.constant 0 : i32
    %c0_i32_0 = arith.constant 0 : i32
    %c0_i32_1 = arith.constant 0 : i32
    return %c0_i32, %arg1, %c0_i32_0 : i32, i32, i32
  }
  func.func @transform_3(%arg0: i32, %arg1: i32) -> (i32, i32, i32) {
    %c0_i32 = arith.constant 0 : i32
    %c0_i32_0 = arith.constant 0 : i32
    return %arg0, %arg1, %c0_i32 : i32, i32, i32
  }
}

</mosaic_0001>

<llo_original>
// kernel: tpu_custom_call.1
$region0: #{tpu_custom_call.1}
  #allocation0 [shape = 'u32[]', space=smem, size = 0x4, offset = 0x4, fixed_abs, tag = 'smem constant byte address 0x4 - core index']
  #allocation1 [shape = 'u32[144,128]{1,0:T(1,128)}', space=vmem, size = 0x12000, scoped, tag = 'internal scratch']
  %s0 = inlined_call_operand.hbm [shape: f32[2,16,512], index: 0, kind: input, shape index: {}]
  %s1 = inlined_call_operand.hbm [shape: f32[1,16,512], index: 1, kind: input, shape index: {}]
  %s2 = inlined_call_operand.hbm [shape: f32[1,16,512], index: 2, kind: input, shape index: {}]
  %s3 = inlined_call_operand.hbm [shape: f32[2,16,512], index: 3, kind: output, shape index: {}]
  %s4 = sld [smem:[#allocation0]]
  $region34: #{tpu_custom_call.1} parent=0
    _
  %s6 = ssub.s32 1, %s4
  %s7 = scalar_select 0, %s6, %s4
  $region1: #{tpu_custom_call.1} parent=0
    #allocation2 [shape = 'u8[65536]{0}', space=vmem, size = 0x10000, scoped, tag = 'input window, operand 0, single buffered']
    #allocation3 [shape = 's32[1]{0}', space=sflag, size = 0x4, scoped, tag = 'scoped memory for tpu_custom_call.1']
    #allocation4 [shape = 's32[1]{0}', space=sflag, size = 0x4, scoped, tag = 'scoped memory for tpu_custom_call.1']
    #allocation5 [shape = 'u8[32768]{0}', space=vmem, size = 0x8000, scoped, tag = 'input window, operand 1, single buffered']
    #allocation6 [shape = 's32[1]{0}', space=sflag, size = 0x4, scoped, tag = 'scoped memory for tpu_custom_call.1']
    #allocation7 [shape = 'u8[32768]{0}', space=vmem, size = 0x8000, scoped, tag = 'input window, operand 2, single buffered']
    #allocation8 [shape = 'u8[65536]{0}', space=vmem, size = 0x10000, scoped, tag = 'output window, operand 0, single buffered']
    %8 = vsyncpa [#allocation3], 0
    %9 = vsyncpa [#allocation6], 0
    %10 = vsyncpa [#allocation4], 0
    // Predicated region
    $region2: #{tpu_custom_call.1} parent=1 // pred_check
      _
    $region3: #{tpu_custom_call.1} parent=1 // pred_check_branch
      %12 = sbr.rel (0) target = $region5
    $region4: #{tpu_custom_call.1} parent=1 // pred_region
      %s14 = ssub.s32 2048, 2048
      %15 = vsyncadd [#allocation3], %s14
      %s16 = sshll.u32 [#allocation2], 4
      %s17 = int_to_ptr.vmem [resolvable:$true] %s16
      %22 = dma.hbm_to_vmem [thread:$0]  %s0, 2048, %s17, [#allocation3], 512, 512, 32
    $region5: #{tpu_custom_call.1} parent=1 // pred_fallthru
      _
    // Predicated region
    $region6: #{tpu_custom_call.1} parent=1 // pred_check
      _
    $region7: #{tpu_custom_call.1} parent=1 // pred_check_branch
      %24 = sbr.rel (0) target = $region9
    $region8: #{tpu_custom_call.1} parent=1 // pred_region
      %s26 = ssub.s32 1024, 1024
      %27 = vsyncadd [#allocation6], %s26
      %s28 = sshll.u32 [#allocation5], 4
      %s29 = int_to_ptr.vmem [resolvable:$true] %s28
      %34 = dma.hbm_to_vmem [thread:$0]  %s1, 1024, %s29, [#allocation6], 512, 512, 32
    $region9: #{tpu_custom_call.1} parent=1 // pred_fallthru
      _
    // Predicated region
    $region10: #{tpu_custom_call.1} parent=1 // pred_check
      _
    $region11: #{tpu_custom_call.1} parent=1 // pred_check_branch
      %36 = sbr.rel (0) target = $region13
    $region12: #{tpu_custom_call.1} parent=1 // pred_region
      %s38 = ssub.s32 1024, 1024
      %39 = vsyncadd [#allocation6], %s38
      %s40 = sshll.u32 [#allocation7], 4
      %s41 = int_to_ptr.vmem [resolvable:$true] %s40
      %46 = dma.hbm_to_vmem [thread:$0]  %s2, 1024, %s41, [#allocation6], 512, 512, 32
    $region13: #{tpu_custom_call.1} parent=1 // pred_fallthru
      _
    // Predicated region
    $region14: #{tpu_custom_call.1} parent=1 // pred_check
      _
    $region15: #{tpu_custom_call.1} parent=1 // pred_check_branch
      %48 = sbr.rel (0) target = $region17
    $region16: #{tpu_custom_call.1} parent=1 // pred_region
      %49 = dma.done [#allocation3], 2048
    $region17: #{tpu_custom_call.1} parent=1 // pred_fallthru
      _
    // Predicated region
    $region18: #{tpu_custom_call.1} parent=1 // pred_check
      _
    $region19: #{tpu_custom_call.1} parent=1 // pred_check_branch
      %51 = sbr.rel (0) target = $region21
    $region20: #{tpu_custom_call.1} parent=1 // pred_region
      %52 = dma.done [#allocation6], 1024
    $region21: #{tpu_custom_call.1} parent=1 // pred_fallthru
      _
    // Predicated region
    $region22: #{tpu_custom_call.1} parent=1 // pred_check
      _
    $region23: #{tpu_custom_call.1} parent=1 // pred_check_branch
      %54 = sbr.rel (0) target = $region25
    $region24: #{tpu_custom_call.1} parent=1 // pred_region
      %55 = dma.done [#allocation6], 1024
    $region25: #{tpu_custom_call.1} parent=1 // pred_fallthru
      _
    %v56 = vld [vmem:[#allocation2] sm:$0xff]
    %v57 = vld [vmem:[#allocation2 + $0x8] sm:$0xff]
    %v58 = vld [vmem:[#allocation2 + $0x10] sm:$0xff]
    %v59 = vld [vmem:[#allocation2 + $0x18] sm:$0xff]
    %v60 = vld [vmem:[#allocation2 + $0x20] sm:$0xff]
    %v61 = vld [vmem:[#allocation2 + $0x28] sm:$0xff]
    %v62 = vld [vmem:[#allocation2 + $0x30] sm:$0xff]
    %v63 = vld [vmem:[#allocation2 + $0x38] sm:$0xff]
    %v64 = vld [vmem:[#allocation2 + $0x40] sm:$0xff]
    %v65 = vld [vmem:[#allocation2 + $0x48] sm:$0xff]
    %v66 = vld [vmem:[#allocation2 + $0x50] sm:$0xff]
    %v67 = vld [vmem:[#allocation2 + $0x58] sm:$0xff]
    %v68 = vld [vmem:[#allocation2 + $0x60] sm:$0xff]
    %v69 = vld [vmem:[#allocation2 + $0x68] sm:$0xff]
    %v70 = vld [vmem:[#allocation2 + $0x70] sm:$0xff]
    %v71 = vld [vmem:[#allocation2 + $0x78] sm:$0xff]
    %v72 = vadd.f32 %v56, %v57
    %v73 = vadd.f32 %v72, %v58
    %v74 = vadd.f32 %v73, %v59
    %75 = vadd.xlane.f32.xlu0 %v74
    %v76 = vpop.xlane.xlu0 %75
    %v77 = vadd.f32 %v60, %v61
    %v78 = vadd.f32 %v77, %v62
    %v79 = vadd.f32 %v78, %v63
    %80 = vadd.xlane.f32.xlu0 %v79
    %v81 = vpop.xlane.xlu0 %80
    %v82 = vadd.f32 %v64, %v65
    %v83 = vadd.f32 %v82, %v66
    %v84 = vadd.f32 %v83, %v67
    %85 = vadd.xlane.f32.xlu0 %v84
    %v86 = vpop.xlane.xlu0 %85
    %v87 = vadd.f32 %v68, %v69
    %v88 = vadd.f32 %v87, %v70
    %v89 = vadd.f32 %v88, %v71
    %90 = vadd.xlane.f32.xlu0 %v89
    %v91 = vpop.xlane.xlu0 %90
    %v92 = vmul.f32 %v56, %v56
    %v93 = vmul.f32 %v57, %v57
    %v94 = vmul.f32 %v58, %v58
    %v95 = vmul.f32 %v59, %v59
    %v96 = vmul.f32 %v60, %v60
    %v97 = vmul.f32 %v61, %v61
    %v98 = vmul.f32 %v62, %v62
    %v99 = vmul.f32 %v63, %v63
    %v100 = vmul.f32 %v64, %v64
    %v101 = vmul.f32 %v65, %v65
    %v102 = vmul.f32 %v66, %v66
    %v103 = vmul.f32 %v67, %v67
    %v104 = vmul.f32 %v68, %v68
    %v105 = vmul.f32 %v69, %v69
    %v106 = vmul.f32 %v70, %v70
    %v107 = vmul.f32 %v71, %v71
    %v108 = vadd.f32 %v92, %v93
    %v109 = vadd.f32 %v108, %v94
    %v110 = vadd.f32 %v109, %v95
    %111 = vadd.xlane.f32.xlu0 %v110
    %v112 = vpop.xlane.xlu0 %111
    %v113 = vadd.f32 %v96, %v97
    %v114 = vadd.f32 %v113, %v98
    %v115 = vadd.f32 %v114, %v99
    %116 = vadd.xlane.f32.xlu0 %v115
    %v117 = vpop.xlane.xlu0 %116
    %v118 = vadd.f32 %v100, %v101
    %v119 = vadd.f32 %v118, %v102
    %v120 = vadd.f32 %v119, %v103
    %121 = vadd.xlane.f32.xlu0 %v120
    %v122 = vpop.xlane.xlu0 %121
    %v123 = vadd.f32 %v104, %v105
    %v124 = vadd.f32 %v123, %v106
    %v125 = vadd.f32 %v124, %v107
    %126 = vadd.xlane.f32.xlu0 %v125
    %v127 = vpop.xlane.xlu0 %126
    %v128 = vmul.f32 %v76, 0.001953125
    %v129 = vmul.f32 %v81, 0.001953125
    %v130 = vmul.f32 %v86, 0.001953125
    %v131 = vmul.f32 %v91, 0.001953125
    %v132 = vmul.f32 %v76, %v128
    %v133 = vmul.f32 %v81, %v129
    %v134 = vmul.f32 %v86, %v130
    %v135 = vmul.f32 %v91, %v131
    %v136 = vsub.f32 %v112, %v132
    %v137 = vsub.f32 %v117, %v133
    %v138 = vsub.f32 %v122, %v134
    %v139 = vsub.f32 %v127, %v135
    %v140 = vmul.f32 %v136, 0.0019569471
    %v141 = vmul.f32 %v137, 0.0019569471
    %v142 = vmul.f32 %v138, 0.0019569471
    %v143 = vmul.f32 %v139, 0.0019569471
    %v144 = vmax.f32 %v140, 0.0
    %v145 = vmax.f32 %v141, 0.0
    %v146 = vmax.f32 %v142, 0.0
    %v147 = vmax.f32 %v143, 0.0
    %v148 = vadd.f32 %v144, 1e-05
    %v149 = vadd.f32 %v145, 1e-05
    %v150 = vadd.f32 %v146, 1e-05
    %v151 = vadd.f32 %v147, 1e-05
    %v152 = vrsqrt.pop %v148
    %v153 = vrsqrt.pop %v149
    %v154 = vrsqrt.pop %v150
    %v155 = vrsqrt.pop %v151
    %v156 = vsub.f32 %v56, %v128
    %v157 = vsub.f32 %v57, %v128
    %v158 = vsub.f32 %v58, %v128
    %v159 = vsub.f32 %v59, %v128
    %v160 = vsub.f32 %v60, %v129
    %v161 = vsub.f32 %v61, %v129
    %v162 = vsub.f32 %v62, %v129
    %v163 = vsub.f32 %v63, %v129
    %v164 = vsub.f32 %v64, %v130
    %v165 = vsub.f32 %v65, %v130
    %v166 = vsub.f32 %v66, %v130
    %v167 = vsub.f32 %v67, %v130
    %v168 = vsub.f32 %v68, %v131
    %v169 = vsub.f32 %v69, %v131
    %v170 = vsub.f32 %v70, %v131
    %v171 = vsub.f32 %v71, %v131
    %v172 = vmul.f32 %v156, %v152
    %v173 = vmul.f32 %v157, %v152
    %v174 = vmul.f32 %v158, %v152
    %v175 = vmul.f32 %v159, %v152
    %v176 = vmul.f32 %v160, %v153
    %v177 = vmul.f32 %v161, %v153
    %v178 = vmul.f32 %v162, %v153
    %v179 = vmul.f32 %v163, %v153
    %v180 = vmul.f32 %v164, %v154
    %v181 = vmul.f32 %v165, %v154
    %v182 = vmul.f32 %v166, %v154
    %v183 = vmul.f32 %v167, %v154
    %v184 = vmul.f32 %v168, %v155
    %v185 = vmul.f32 %v169, %v155
    %v186 = vmul.f32 %v170, %v155
    %v187 = vmul.f32 %v171, %v155
    %v188 = vld [vmem:[#allocation5] sm:$0xff]
    %v189 = vld [vmem:[#allocation5 + $0x8] sm:$0xff]
    %v190 = vld [vmem:[#allocation5 + $0x10] sm:$0xff]
    %v191 = vld [vmem:[#allocation5 + $0x18] sm:$0xff]
    %v192 = vld [vmem:[#allocation5 + $0x20] sm:$0xff]
    %v193 = vld [vmem:[#allocation5 + $0x28] sm:$0xff]
    %v194 = vld [vmem:[#allocation5 + $0x30] sm:$0xff]
    %v195 = vld [vmem:[#allocation5 + $0x38] sm:$0xff]
    %v196 = vld [vmem:[#allocation7] sm:$0xff]
    %v197 = vld [vmem:[#allocation7 + $0x8] sm:$0xff]
    %v198 = vld [vmem:[#allocation7 + $0x10] sm:$0xff]
    %v199 = vld [vmem:[#allocation7 + $0x18] sm:$0xff]
    %v200 = vld [vmem:[#allocation7 + $0x20] sm:$0xff]
    %v201 = vld [vmem:[#allocation7 + $0x28] sm:$0xff]
    %v202 = vld [vmem:[#allocation7 + $0x30] sm:$0xff]
    %v203 = vld [vmem:[#allocation7 + $0x38] sm:$0xff]
    %v204 = vmul.f32 %v172, %v188
    %v205 = vmul.f32 %v173, %v189
    %v206 = vmul.f32 %v174, %v190
    %v207 = vmul.f32 %v175, %v191
    %v208 = vmul.f32 %v176, %v192
    %v209 = vmul.f32 %v177, %v193
    %v210 = vmul.f32 %v178, %v194
    %v211 = vmul.f32 %v179, %v195
    %v212 = vmul.f32 %v180, %v188
    %v213 = vmul.f32 %v181, %v189
    %v214 = vmul.f32 %v182, %v190
    %v215 = vmul.f32 %v183, %v191
    %v216 = vmul.f32 %v184, %v192
    %v217 = vmul.f32 %v185, %v193
    %v218 = vmul.f32 %v186, %v194
    %v219 = vmul.f32 %v187, %v195
    %v220 = vadd.f32 %v204, %v196
    %v221 = vadd.f32 %v205, %v197
    %v222 = vadd.f32 %v206, %v198
    %v223 = vadd.f32 %v207, %v199
    %v224 = vadd.f32 %v208, %v200
    %v225 = vadd.f32 %v209, %v201
    %v226 = vadd.f32 %v210, %v202
    %v227 = vadd.f32 %v211, %v203
    %v228 = vadd.f32 %v212, %v196
    %v229 = vadd.f32 %v213, %v197
    %v230 = vadd.f32 %v214, %v198
    %v231 = vadd.f32 %v215, %v199
    %v232 = vadd.f32 %v216, %v200
    %v233 = vadd.f32 %v217, %v201
    %v234 = vadd.f32 %v218, %v202
    %v235 = vadd.f32 %v219, %v203
    %236 = vst [vmem:[#allocation8] sm:$0xff] %v220
    %237 = vst [vmem:[#allocation8 + $0x8] sm:$0xff] %v221
    %238 = vst [vmem:[#allocation8 + $0x10] sm:$0xff] %v222
    %239 = vst [vmem:[#allocation8 + $0x18] sm:$0xff] %v223
    %240 = vst [vmem:[#allocation8 + $0x20] sm:$0xff] %v224
    %241 = vst [vmem:[#allocation8 + $0x28] sm:$0xff] %v225
    %242 = vst [vmem:[#allocation8 + $0x30] sm:$0xff] %v226
    %243 = vst [vmem:[#allocation8 + $0x38] sm:$0xff] %v227
    %244 = vst [vmem:[#allocation8 + $0x40] sm:$0xff] %v228
    %245 = vst [vmem:[#allocation8 + $0x48] sm:$0xff] %v229
    %246 = vst [vmem:[#allocation8 + $0x50] sm:$0xff] %v230
    %247 = vst [vmem:[#allocation8 + $0x58] sm:$0xff] %v231
    %248 = vst [vmem:[#allocation8 + $0x60] sm:$0xff] %v232
    %249 = vst [vmem:[#allocation8 + $0x68] sm:$0xff] %v233
    %250 = vst [vmem:[#allocation8 + $0x70] sm:$0xff] %v234
    %251 = vst [vmem:[#allocation8 + $0x78] sm:$0xff] %v235
    // Predicated region
    $region26: #{tpu_custom_call.1} parent=1 // pred_check
      _
    $region27: #{tpu_custom_call.1} parent=1 // pred_check_branch
      %253 = sbr.rel (0) target = $region29
    $region28: #{tpu_custom_call.1} parent=1 // pred_region
      %s255 = ssub.s32 2048, 2048
      %256 = vsyncadd [#allocation4], %s255
      %s257 = sshll.u32 [#allocation8], 4
      %s258 = int_to_ptr.vmem [resolvable:$true] %s257
      %263 = dma.vmem_to_hbm [thread:$0]  %s258, 2048, %s3, [#allocation4], 512, 512, 32
    $region29: #{tpu_custom_call.1} parent=1 // pred_fallthru
      _
    // Predicated region
    $region30: #{tpu_custom_call.1} parent=1 // pred_check
      _
    $region31: #{tpu_custom_call.1} parent=1 // pred_check_branch
      %265 = sbr.rel (0) target = $region33
    $region32: #{tpu_custom_call.1} parent=1 // pred_region
      %266 = dma.done [#allocation4], 2048
    $region33: #{tpu_custom_call.1} parent=1 // pred_fallthru
      _
    %267 = vsyncpa [#allocation3], 1
    %268 = vsyncpa [#allocation6], 1
    %269 = vsyncpa [#allocation4], 1

</llo_original>
